<compile_context>
chip_gen: v7x
topology: tpu7x:2x2x1
jax: 0.10.0
libtpu: 0.0.40
codegen_flags: <defaults>
</compile_context>

<pallas_src>
import functools

import jax
import jax.numpy as jnp
from jax.experimental import pallas as pl
from jax.experimental.pallas import tpu as pltpu

_VMEM_LIMIT = 64 * 1024 * 1024


def _ru(n, m):
    """Round n up to a multiple of m."""
    return ((n + m - 1) // m) * m


def _pick_tile(n, candidates):
    for c in candidates:
        if n % c == 0:
            return c
    return n


def _row_tiling(m):
    """Row tile / padded row count; never collapse to tiny tiles for big M."""
    if m >= 256:
        tm = 256
        return tm, _ru(m, tm)
    mp = _ru(m, 8)
    return mp, mp


# ---------------------------------------------------------------------------
# Kernel 1: input projection  xg = x @ W_ih + (b_ih + b_hh), all timesteps.
# 1-D grid over row tiles; W_ih / bias are grid-invariant (fetched once).
# ---------------------------------------------------------------------------
def _in_proj_kernel(x_ref, w_ref, b_ref, o_ref):
    acc = jnp.dot(x_ref[...], w_ref[...], preferred_element_type=jnp.float32)
    o_ref[...] = acc + b_ref[...]


def _input_projection(x, w, b):
    M, K = x.shape
    N = w.shape[1]
    tm, Mp = _row_tiling(M)
    if Mp != M:
        x = jnp.pad(x, ((0, Mp - M), (0, 0)))
    out = pl.pallas_call(
        _in_proj_kernel,
        out_shape=jax.ShapeDtypeStruct((Mp, N), jnp.float32),
        grid_spec=pltpu.PrefetchScalarGridSpec(
            num_scalar_prefetch=0,
            grid=(Mp // tm,),
            in_specs=[
                pl.BlockSpec((tm, K), lambda i: (i, 0)),
                pl.BlockSpec((K, N), lambda i: (0, 0)),   # resident W_ih (bf16)
                pl.BlockSpec((1, N), lambda i: (0, 0)),   # resident bias (f32)
            ],
            out_specs=pl.BlockSpec((tm, N), lambda i: (i, 0)),
        ),
        compiler_params=pltpu.CompilerParams(
            dimension_semantics=("parallel",),
            vmem_limit_bytes=_VMEM_LIMIT),
    )(x, w, b)
    return out[:M]


# ---------------------------------------------------------------------------
# Kernel 2: LSTM recurrence, time-tiled.  Grid = (batch shards, time tiles);
# h/c live in VMEM scratch and persist across the (sequential) time tiles.
# xg already holds x @ W_ih + (b_ih + b_hh).  Output is batch-major.
# ---------------------------------------------------------------------------
def _lstm_kernel(xg_ref, whh_ref, hall_ref, h_sc, c_sc, *, hidden, tt, unroll):
    H = hidden

    @pl.when(pl.program_id(1) == 0)          # new batch shard: reset state
    def _():
        h_sc[...] = jnp.zeros_like(h_sc)
        c_sc[...] = jnp.zeros_like(c_sc)

    whh = whh_ref[...]                        # bf16, hoisted out of the loop

    def step(k, carry):
        xg = xg_ref[k]                        # (Bpc, 4Hp) f32 pre-activations
        h_prev = h_sc[...]
        gates = xg + jnp.dot(h_prev.astype(jnp.bfloat16), whh,
                             preferred_element_type=jnp.float32)
        # PyTorch gate order i, f, g, o; slices lane-aligned (Hp mult of 128)
        i_g = jax.nn.sigmoid(gates[:, 0 * H:1 * H])
        f_g = jax.nn.sigmoid(gates[:, 1 * H:2 * H])
        g_g = jnp.tanh(gates[:, 2 * H:3 * H])
        o_g = jax.nn.sigmoid(gates[:, 3 * H:4 * H])
        c_new = f_g * c_sc[...] + i_g * g_g
        h_new = o_g * jnp.tanh(c_new)
        c_sc[...] = c_new
        h_sc[...] = h_new
        # batch-major write: one sublane per step (avoids an XLA transpose)
        hall_ref[:, pl.ds(k, 1), :] = h_new[:, None, :]
        return carry

    jax.lax.fori_loop(0, tt, step, 0, unroll=unroll)


def _lstm(xg, w_hh, *, Bp, nb, Hp, tt):
    Tpad = xg.shape[0]
    Bpc = Bp // nb
    unroll = 2 if (tt % 2 == 0 and tt >= 2) else 1
    kernel = functools.partial(_lstm_kernel, hidden=Hp, tt=tt, unroll=unroll)
    return pl.pallas_call(
        kernel,
        out_shape=jax.ShapeDtypeStruct((Bp, Tpad, Hp), jnp.float32),
        grid_spec=pltpu.PrefetchScalarGridSpec(
            num_scalar_prefetch=0,
            grid=(nb, Tpad // tt),
            in_specs=[
                pl.BlockSpec((tt, Bpc, 4 * Hp), lambda b, t: (t, b, 0)),
                pl.BlockSpec((Hp, 4 * Hp), lambda b, t: (0, 0)),  # resident w_hh
            ],
            out_specs=pl.BlockSpec((Bpc, tt, Hp), lambda b, t: (b, t, 0)),
            scratch_shapes=[pltpu.VMEM((Bpc, Hp), jnp.float32),   # h state
                            pltpu.VMEM((Bpc, Hp), jnp.float32)],  # c state
        ),
        compiler_params=pltpu.CompilerParams(
            dimension_semantics=("parallel", "arbitrary"),
            vmem_limit_bytes=_VMEM_LIMIT),
    )(xg, w_hh)


# ---------------------------------------------------------------------------
# Kernel 3: fused MLP head  logits = relu(h @ W1 + b1) @ W2 + b2.
# Rows outer ("parallel"), vocab tiles inner ("arbitrary"); the first-layer
# activation is computed once per row tile into a VMEM scratch (pl.when j==0)
# and reused for every vocab tile; W2 is fully resident, pre-tiled (nv,H2,tn).
# ---------------------------------------------------------------------------
def _mlp_head_kernel(h_ref, w1_ref, b1_ref, w2_ref, b2_ref, o_ref, hid_sc):
    j = pl.program_id(1)

    @pl.when(j == 0)
    def _():
        hid = jnp.dot(h_ref[...].astype(jnp.bfloat16), w1_ref[...],
                      preferred_element_type=jnp.float32)
        hid_sc[...] = jnp.maximum(hid + b1_ref[...], 0.0)

    logits = jnp.dot(hid_sc[...].astype(jnp.bfloat16), w2_ref[j],
                     preferred_element_type=jnp.float32)
    o_ref[...] = logits + b2_ref[...]


def _mlp_head(h, w1, b1, w2, b2):
    M, Hp = h.shape
    H2p = w1.shape[1]
    Vp = w2.shape[1]
    tm, Mp = _row_tiling(M)
    if Mp != M:
        h = jnp.pad(h, ((0, Mp - M), (0, 0)))
    tn = _pick_tile(Vp, (512, 256, 128))
    nv = Vp // tn
    # pre-tile W2 so the kernel can index vocab tiles on the leading dim
    w2t = jnp.transpose(w2.reshape(H2p, nv, tn), (1, 0, 2))        # (nv,H2p,tn)
    out = pl.pallas_call(
        _mlp_head_kernel,
        out_shape=jax.ShapeDtypeStruct((Mp, Vp), jnp.float32),
        grid_spec=pltpu.PrefetchScalarGridSpec(
            num_scalar_prefetch=0,
            grid=(Mp // tm, nv),
            in_specs=[
                pl.BlockSpec((tm, Hp), lambda i, j: (i, 0)),       # reused over j
                pl.BlockSpec((Hp, H2p), lambda i, j: (0, 0)),      # resident W1
                pl.BlockSpec((1, H2p), lambda i, j: (0, 0)),       # resident b1
                pl.BlockSpec((nv, H2p, tn), lambda i, j: (0, 0, 0)),  # resident W2
                pl.BlockSpec((1, tn), lambda i, j: (0, j)),
            ],
            out_specs=pl.BlockSpec((tm, tn), lambda i, j: (i, j)),
            scratch_shapes=[pltpu.VMEM((tm, H2p), jnp.float32)],   # relu(h@W1+b1)
        ),
        compiler_params=pltpu.CompilerParams(
            dimension_semantics=("parallel", "arbitrary"),
            vmem_limit_bytes=_VMEM_LIMIT),
    )(h, w1, b1, w2t, b2)
    return out[:M]


# ---------------------------------------------------------------------------
# Wrapper replicating DecoderRNN.forward
# ---------------------------------------------------------------------------
def decoder_rnn_forward(features, captions, params):
    """features: (B, E) f32, captions: (B, T) i32 -> logits (B, T, V) f32."""
    f32, bf16 = jnp.float32, jnp.bfloat16
    B, E = features.shape
    T = captions.shape[1]
    H = params["w_hh"].shape[0]                    # w_hh stored as (H, 4H)
    H2 = params["w1"].shape[1]
    V = params["w2"].shape[1]

    Bp = _ru(B, 8)
    Ep = _ru(E, 128)
    Hp = _ru(H, 128)
    H2p = _ru(H2, 128)
    Vp = _ru(V, 128)

    # batch shards across TensorCores (only worth it for big batches / v7x)
    nb = 2 if (Bp >= 256 and Bp % 16 == 0) else 1
    Bpc = Bp // nb

    # time tile sized from a VMEM byte budget (double-buffered xg + h blocks)
    per_step = 2 * (Bpc * 4 * Hp + Bpc * Hp) * 4
    tt = int(max(1, min(T, (16 * 2 ** 20) // per_step)))
    if tt < T:                                      # keep (8,128) sublane rule
        tt = max(8, (tt // 8) * 8)
    Tpad = _ru(T, tt)

    # --- glue: embedding lookup, concat features, drop last timestep ---------
    w_emb = params["w_emb"].astype(f32)
    embeds = jnp.take(w_emb, captions, axis=0)                       # (B, T, E)
    x = jnp.concatenate([features.astype(f32)[:, None, :], embeds],
                        axis=1)[:, :T, :]                            # (B, T, E)
    x = jnp.pad(x, ((0, Bp - B), (0, Tpad - T), (0, Ep - E))).astype(bf16)

    # --- pad & repack weights (per-gate so i/f/g/o slices stay Hp-aligned) ---
    def pad_gates(w, rows_to, h_in):
        parts = [w[:, k * h_in:(k + 1) * h_in] for k in range(4)]
        parts = [jnp.pad(p, ((0, rows_to - p.shape[0]), (0, Hp - h_in)))
                 for p in parts]
        return jnp.concatenate(parts, axis=1)

    w_ih = pad_gates(params["w_ih"].astype(f32), Ep, H).astype(bf16)  # (Ep,4Hp)
    w_hh = pad_gates(params["w_hh"].astype(f32), Hp, H).astype(bf16)  # (Hp,4Hp)
    b_g = pad_gates((params["b_ih"] + params["b_hh"]).astype(f32), 1, H)
    w1 = jnp.pad(params["w1"].astype(f32),
                 ((0, Hp - H), (0, H2p - H2))).astype(bf16)
    b1 = jnp.pad(params["b1"].astype(f32), ((0, 0), (0, H2p - H2)))
    w2 = jnp.pad(params["w2"].astype(f32),
                 ((0, H2p - H2), (0, Vp - V))).astype(bf16)
    b2 = jnp.pad(params["b2"].astype(f32), ((0, 0), (0, Vp - V)))

    # --- hoisted input projection: one (Tpad*Bp, Ep) @ (Ep, 4Hp) matmul ------
    x_tm = jnp.transpose(x, (1, 0, 2)).reshape(Tpad * Bp, Ep)        # time-major
    xg = _input_projection(x_tm, w_ih, b_g).reshape(Tpad, Bp, 4 * Hp)

    # --- time-tiled LSTM recurrence (batch-major hidden states out) ----------
    h_all = _lstm(xg, w_hh, Bp=Bp, nb=nb, Hp=Hp, tt=tt)              # (Bp,Tpad,Hp)

    # --- fused vocab head (reshape only; no transpose of H-sized data) -------
    h_rows = h_all.reshape(Bp * Tpad, Hp)
    logits = _mlp_head(h_rows, w1, b1, w2, b2)                       # (Bp*Tpad,Vp)
    return logits.reshape(Bp, Tpad, Vp)[:B, :T, :V]                  # (B, T, V)


# ---------------------------------------------------------------------------
# Plain-JAX reference (lax.scan LSTM, f32 HIGHEST) for numerical validation.
# ---------------------------------------------------------------------------
def _reference_forward(features, captions, params):
    w_emb = params["w_emb"]
    B = features.shape[0]
    T = captions.shape[1]
    H = params["w_hh"].shape[0]          # w_hh is (H, 4H) pre-transposed
    hp = jax.lax.Precision.HIGHEST

    embeds = jnp.take(w_emb, captions, axis=0)
    x = jnp.concatenate([features[:, None, :], embeds], axis=1)[:, :T, :]

    def step(carry, x_t):
        h, c = carry
        gates = (jnp.dot(x_t, params["w_ih"], precision=hp) + params["b_ih"]
                 + jnp.dot(h, params["w_hh"], precision=hp) + params["b_hh"])
        i = jax.nn.sigmoid(gates[:, :H])
        f = jax.nn.sigmoid(gates[:, H:2 * H])
        g = jnp.tanh(gates[:, 2 * H:3 * H])
        o = jax.nn.sigmoid(gates[:, 3 * H:])
        c = f * c + i * g
        h = o * jnp.tanh(c)
        return (h, c), h

    h0 = jnp.zeros((B, H), jnp.float32)
    _, hs = jax.lax.scan(step, (h0, h0), jnp.transpose(x, (1, 0, 2)))
    hs = jnp.transpose(hs, (1, 0, 2))                                # (B, T, H)
    hid1 = jnp.maximum(jnp.dot(hs, params["w1"], precision=hp) + params["b1"],
                       0.0)
    return jnp.dot(hid1, params["w2"], precision=hp) + params["b2"]


if __name__ == "__main__":
    # Small shapes consistent with the module's forward.
    B, T = 2, 8
    embed_size, hidden_size, hidden_size_2, vocab_size = 32, 32, 32, 64

    key = jax.random.PRNGKey(0)
    ks = jax.random.split(key, 11)
    scale = 0.1

    params = {
        # nn.Embedding(vocab_size, embed_size)
        "w_emb": scale * jax.random.normal(ks[0], (vocab_size, embed_size), jnp.float32),
        # nn.LSTM(embed_size, hidden_size): weights pre-transposed for x @ W
        "w_ih": scale * jax.random.normal(ks[1], (embed_size, 4 * hidden_size), jnp.float32),
        "w_hh": scale * jax.random.normal(ks[2], (hidden_size, 4 * hidden_size), jnp.float32),
        "b_ih": scale * jax.random.normal(ks[3], (1, 4 * hidden_size), jnp.float32),
        "b_hh": scale * jax.random.normal(ks[4], (1, 4 * hidden_size), jnp.float32),
        # nn.Linear(hidden_size, hidden_size_2), nn.Linear(hidden_size_2, vocab_size)
        "w1": scale * jax.random.normal(ks[5], (hidden_size, hidden_size_2), jnp.float32),
        "b1": scale * jax.random.normal(ks[6], (1, hidden_size_2), jnp.float32),
        "w2": scale * jax.random.normal(ks[7], (hidden_size_2, vocab_size), jnp.float32),
        "b2": scale * jax.random.normal(ks[8], (1, vocab_size), jnp.float32),
    }

    features = jax.random.normal(ks[9], (B, embed_size), jnp.float32)
    captions = jax.random.randint(ks[10], (B, T), 0, vocab_size, jnp.int32)

    out = jax.block_until_ready(decoder_rnn_forward(features, captions, params))
    ref = jax.block_until_ready(_reference_forward(features, captions, params))

    assert out.shape == (B, T, vocab_size), out.shape
    # Tolerance sized for bf16 matmul operands (f32 accumulation) vs f32 ref.
    err = float(jnp.max(jnp.abs(out - ref)))
    assert jnp.allclose(out, ref, atol=2e-2, rtol=2e-2), err

    print("KERNEL_OK")
</pallas_src>

<mosaic_0001>
module attributes {stable_mosaic.version = 11 : i64} {
  func.func @_in_proj_kernel(%arg0: i32, %arg1: memref<64x128xbf16, #tpu.memory_space<vmem>>, %arg2: memref<128x512xbf16, #tpu.memory_space<vmem>>, %arg3: memref<1x512xf32, #tpu.memory_space<vmem>>, %arg4: memref<64x512xf32, #tpu.memory_space<vmem>>) attributes {dimension_semantics = [#tpu.dimension_semantics<parallel>], iteration_bounds = array<i64: 1>, scalar_prefetch = 0 : i64, scratch_operands = 0 : i64, tpu.core_type = #tpu.core_type<tc>, window_params = [{transform_indices = @transform_0, window_bounds = array<i64: 64, 128>}, {pipeline_mode = #tpu.pipeline_mode<synchronous>, transform_indices = @transform_1, window_bounds = array<i64: 128, 512>}, {pipeline_mode = #tpu.pipeline_mode<synchronous>, transform_indices = @transform_2, window_bounds = array<i64: 1, 512>}, {transform_indices = @transform_3, window_bounds = array<i64: 64, 512>}]} {
    %c0 = arith.constant 0 : index
    %c0_0 = arith.constant 0 : index
    %0 = vector.load %arg1[%c0, %c0_0] : memref<64x128xbf16, #tpu.memory_space<vmem>>, vector<64x128xbf16>
    %c0_1 = arith.constant 0 : index
    %c0_2 = arith.constant 0 : index
    %1 = vector.load %arg2[%c0_1, %c0_2] : memref<128x512xbf16, #tpu.memory_space<vmem>>, vector<128x512xbf16>
    %cst = arith.constant dense<0.000000e+00> : vector<64x512xf32>
    %2 = tpu.matmul %0, %1, %cst {dimension_numbers = #tpu.dot_dimension_numbers<[1], [0], [0], [1], [0, 0, 1, 1], [], []>} : vector<64x128xbf16>, vector<128x512xbf16>, vector<64x512xf32> -> vector<64x512xf32>
    %c0_3 = arith.constant 0 : index
    %c0_4 = arith.constant 0 : index
    %3 = vector.load %arg3[%c0_3, %c0_4] : memref<1x512xf32, #tpu.memory_space<vmem>>, vector<1x512xf32>
    %4 = vector.broadcast %3 : vector<1x512xf32> to vector<64x512xf32>
    %5 = arith.addf %2, %4 : vector<64x512xf32>
    %c0_5 = arith.constant 0 : index
    %c0_6 = arith.constant 0 : index
    %6 = vector.load %arg4[%c0_5, %c0_6] : memref<64x512xf32, #tpu.memory_space<vmem>>, vector<64x512xf32>
    tpu.vector_store %arg4[%c0_5, %c0_6], %5 {strides = array<i32>} : memref<64x512xf32, #tpu.memory_space<vmem>>, vector<64x512xf32>,
    return
  }
  func.func @transform_0(%arg0: i32) -> (i32, i32) {
    %c0_i32 = arith.constant 0 : i32
    %c0_i32_0 = arith.constant 0 : i32
    return %arg0, %c0_i32 : i32, i32
  }
  func.func @transform_1(%arg0: i32) -> (i32, i32) {
    %c0_i32 = arith.constant 0 : i32
    %c0_i32_0 = arith.constant 0 : i32
    %c0_i32_1 = arith.constant 0 : i32
    return %c0_i32, %c0_i32_0 : i32, i32
  }
  func.func @transform_2(%arg0: i32) -> (i32, i32) {
    %c0_i32 = arith.constant 0 : i32
    %c0_i32_0 = arith.constant 0 : i32
    %c0_i32_1 = arith.constant 0 : i32
    return %c0_i32, %c0_i32_0 : i32, i32
  }
  func.func @transform_3(%arg0: i32) -> (i32, i32) {
    %c0_i32 = arith.constant 0 : i32
    %c0_i32_0 = arith.constant 0 : i32
    return %arg0, %c0_i32 : i32, i32
  }
}

</mosaic_0001>

<llo_original>
// kernel: tpu_custom_call.1
$region0: #{tpu_custom_call.1}
  #allocation0 [shape = 'u32[]', space=smem, size = 0x4, offset = 0x4, fixed_abs, tag = 'smem constant byte address 0x4 - core index']
  #allocation1 [shape = 'u32[144,128]{1,0:T(1,128)}', space=vmem, size = 0x12000, scoped, tag = 'internal scratch']
  %s0 = inlined_call_operand.hbm [shape: bf16[64,128], index: 0, kind: input, shape index: {}]
  %s1 = inlined_call_operand.hbm [shape: bf16[128,512], index: 1, kind: input, shape index: {}]
  %s2 = inlined_call_operand.hbm [shape: f32[1,512], index: 2, kind: input, shape index: {}]
  %s3 = inlined_call_operand.hbm [shape: f32[64,512], index: 3, kind: output, shape index: {}]
  %s4 = sld [smem:[#allocation0]]
  $region34: #{tpu_custom_call.1} parent=0
    _
  %s6 = ssub.s32 1, %s4
  %s7 = scalar_select 0, %s6, %s4
  $region1: #{tpu_custom_call.1} parent=0
    #allocation2 [shape = 'u8[16384]{0}', space=vmem, size = 0x4000, scoped, tag = 'input window, operand 0, single buffered']
    #allocation3 [shape = 's32[1]{0}', space=sflag, size = 0x4, scoped, tag = 'scoped memory for tpu_custom_call.1']
    #allocation4 [shape = 's32[1]{0}', space=sflag, size = 0x4, scoped, tag = 'scoped memory for tpu_custom_call.1']
    #allocation5 [shape = 'u8[131072]{0}', space=vmem, size = 0x20000, scoped, tag = 'input window, operand 1, single buffered']
    #allocation6 [shape = 's32[1]{0}', space=sflag, size = 0x4, scoped, tag = 'scoped memory for tpu_custom_call.1']
    #allocation7 [shape = 'u8[2048]{0}', space=vmem, size = 0x800, scoped, tag = 'input window, operand 2, single buffered']
    #allocation8 [shape = 'u8[131072]{0}', space=vmem, size = 0x20000, scoped, tag = 'output window, operand 0, single buffered']
    %8 = vsyncpa [#allocation3], 0
    %9 = vsyncpa [#allocation6], 0
    %10 = vsyncpa [#allocation4], 0
    // Predicated region
    $region2: #{tpu_custom_call.1} parent=1 // pred_check
      _
    $region3: #{tpu_custom_call.1} parent=1 // pred_check_branch
      %12 = sbr.rel (0) target = $region5
    $region4: #{tpu_custom_call.1} parent=1 // pred_region
      %s14 = ssub.s32 512, 512
      %15 = vsyncadd [#allocation3], %s14
      %s16 = sshll.u32 [#allocation2], 4
      %s17 = int_to_ptr.vmem [resolvable:$true] %s16
      %22 = dma.hbm_to_vmem [thread:$0]  %s0, 512, %s17, [#allocation3], 64, 64, 4
    $region5: #{tpu_custom_call.1} parent=1 // pred_fallthru
      _
    // Predicated region
    $region6: #{tpu_custom_call.1} parent=1 // pred_check
      _
    $region7: #{tpu_custom_call.1} parent=1 // pred_check_branch
      %24 = sbr.rel (0) target = $region9
    $region8: #{tpu_custom_call.1} parent=1 // pred_region
      %s26 = ssub.s32 4096, 4096
      %27 = vsyncadd [#allocation6], %s26
      %s28 = sshll.u32 [#allocation5], 4
      %s29 = int_to_ptr.vmem [resolvable:$true] %s28
      %34 = dma.hbm_to_vmem [thread:$0]  %s1, 4096, %s29, [#allocation6], 256, 256, 16
    $region9: #{tpu_custom_call.1} parent=1 // pred_fallthru
      _
    // Predicated region
    $region10: #{tpu_custom_call.1} parent=1 // pred_check
      _
    $region11: #{tpu_custom_call.1} parent=1 // pred_check_branch
      %36 = sbr.rel (0) target = $region13
    $region12: #{tpu_custom_call.1} parent=1 // pred_region
      %s38 = ssub.s32 64, 64
      %39 = vsyncadd [#allocation6], %s38
      %s41 = sshll.u32 [#allocation7], 4
      %s42 = int_to_ptr.vmem [resolvable:$true] %s41
      %44 = dma.hbm_to_vmem [thread:$0]  %s2, 64, %s42, [#allocation6]
    $region13: #{tpu_custom_call.1} parent=1 // pred_fallthru
      _
    // Predicated region
    $region14: #{tpu_custom_call.1} parent=1 // pred_check
      _
    $region15: #{tpu_custom_call.1} parent=1 // pred_check_branch
      %46 = sbr.rel (0) target = $region17
    $region16: #{tpu_custom_call.1} parent=1 // pred_region
      %47 = dma.done [#allocation3], 512
    $region17: #{tpu_custom_call.1} parent=1 // pred_fallthru
      _
    // Predicated region
    $region18: #{tpu_custom_call.1} parent=1 // pred_check
      _
    $region19: #{tpu_custom_call.1} parent=1 // pred_check_branch
      %49 = sbr.rel (0) target = $region21
    $region20: #{tpu_custom_call.1} parent=1 // pred_region
      %50 = dma.done [#allocation6], 4096
    $region21: #{tpu_custom_call.1} parent=1 // pred_fallthru
      _
    // Predicated region
    $region22: #{tpu_custom_call.1} parent=1 // pred_check
      _
    $region23: #{tpu_custom_call.1} parent=1 // pred_check_branch
      %52 = sbr.rel (0) target = $region25
    $region24: #{tpu_custom_call.1} parent=1 // pred_region
      %53 = dma.done [#allocation6], 64
    $region25: #{tpu_custom_call.1} parent=1 // pred_fallthru
      _
    %v55 = vld [vmem:[#allocation2] sm:$0xf]
    %v56 = vld [vmem:[#allocation2 + $0x4] sm:$0xf]
    %v57 = vld [vmem:[#allocation2 + $0x8] sm:$0xf]
    %v58 = vld [vmem:[#allocation2 + $0xc] sm:$0xf]
    %v59 = vld [vmem:[#allocation2 + $0x10] sm:$0xf]
    %v60 = vld [vmem:[#allocation2 + $0x14] sm:$0xf]
    %v61 = vld [vmem:[#allocation2 + $0x18] sm:$0xf]
    %v62 = vld [vmem:[#allocation2 + $0x1c] sm:$0xf]
    %v63 = vld [vmem:[#allocation5] sm:$0xff]
    %v64 = vld [vmem:[#allocation5 + $0x8] sm:$0xff]
    %v65 = vld [vmem:[#allocation5 + $0x10] sm:$0xff]
    %v66 = vld [vmem:[#allocation5 + $0x18] sm:$0xff]
    %v67 = vld [vmem:[#allocation5 + $0x20] sm:$0xff]
    %v68 = vld [vmem:[#allocation5 + $0x28] sm:$0xff]
    %v69 = vld [vmem:[#allocation5 + $0x30] sm:$0xff]
    %v70 = vld [vmem:[#allocation5 + $0x38] sm:$0xff]
    %v71 = vld [vmem:[#allocation5 + $0x40] sm:$0xff]
    %v72 = vld [vmem:[#allocation5 + $0x48] sm:$0xff]
    %v73 = vld [vmem:[#allocation5 + $0x50] sm:$0xff]
    %v74 = vld [vmem:[#allocation5 + $0x58] sm:$0xff]
    %v75 = vld [vmem:[#allocation5 + $0x60] sm:$0xff]
    %v76 = vld [vmem:[#allocation5 + $0x68] sm:$0xff]
    %v77 = vld [vmem:[#allocation5 + $0x70] sm:$0xff]
    %v78 = vld [vmem:[#allocation5 + $0x78] sm:$0xff]
    %v79 = vld [vmem:[#allocation5 + $0x80] sm:$0xff]
    %v80 = vld [vmem:[#allocation5 + $0x88] sm:$0xff]
    %v81 = vld [vmem:[#allocation5 + $0x90] sm:$0xff]
    %v82 = vld [vmem:[#allocation5 + $0x98] sm:$0xff]
    %v83 = vld [vmem:[#allocation5 + $0xa0] sm:$0xff]
    %v84 = vld [vmem:[#allocation5 + $0xa8] sm:$0xff]
    %v85 = vld [vmem:[#allocation5 + $0xb0] sm:$0xff]
    %v86 = vld [vmem:[#allocation5 + $0xb8] sm:$0xff]
    %v87 = vld [vmem:[#allocation5 + $0xc0] sm:$0xff]
    %v88 = vld [vmem:[#allocation5 + $0xc8] sm:$0xff]
    %v89 = vld [vmem:[#allocation5 + $0xd0] sm:$0xff]
    %v90 = vld [vmem:[#allocation5 + $0xd8] sm:$0xff]
    %v91 = vld [vmem:[#allocation5 + $0xe0] sm:$0xff]
    %v92 = vld [vmem:[#allocation5 + $0xe8] sm:$0xff]
    %v93 = vld [vmem:[#allocation5 + $0xf0] sm:$0xff]
    %v94 = vld [vmem:[#allocation5 + $0xf8] sm:$0xff]
    %v95 = vld [vmem:[#allocation7] sm:$0xf]
    %v97 = vlaneseq
    %v98 = vshrl.u32 %v97, 7
    %v99 = vsub.s32 0, %v98
    %v100 = vrot.slane %v95, %v99
    %v101 = vlaneseq
    %v102 = vshrl.u32 %v101, 7
    %v103 = vsub.s32 1, %v102
    %v104 = vrot.slane %v95, %v103
    %v105 = vlaneseq
    %v106 = vshrl.u32 %v105, 7
    %v107 = vsub.s32 2, %v106
    %v108 = vrot.slane %v95, %v107
    %v109 = vlaneseq
    %v110 = vshrl.u32 %v109, 7
    %v111 = vsub.s32 3, %v110
    %v112 = vrot.slane %v95, %v111
    %v125 = vunpack.c.l.b16 %v55
    %v126 = vunpack.c.l.b16 %v56
    %v127 = vunpack.c.l.b16 %v57
    %v128 = vunpack.c.l.b16 %v58
    %v129 = vunpack.c.l.b16 %v59
    %v130 = vunpack.c.l.b16 %v60
    %v131 = vunpack.c.l.b16 %v61
    %v132 = vunpack.c.l.b16 %v62
    %v133 = vpack.c.b16 %v126, %v125
    %v134 = vpack.c.b16 %v128, %v127
    %v135 = vpack.c.b16 %v130, %v129
    %v136 = vpack.c.b16 %v132, %v131
    %v173 = vunpack.c.l.b16 %v63
    %v174 = vunpack.c.h.b16 %v63
    %v175 = vunpack.c.l.b16 %v64
    %v176 = vunpack.c.h.b16 %v64
    %v177 = vunpack.c.l.b16 %v65
    %v178 = vunpack.c.h.b16 %v65
    %v179 = vunpack.c.l.b16 %v66
    %v180 = vunpack.c.h.b16 %v66
    %v181 = vunpack.c.l.b16 %v67
    %v182 = vunpack.c.h.b16 %v67
    %v183 = vunpack.c.l.b16 %v68
    %v184 = vunpack.c.h.b16 %v68
    %v185 = vunpack.c.l.b16 %v69
    %v186 = vunpack.c.h.b16 %v69
    %v187 = vunpack.c.l.b16 %v70
    %v188 = vunpack.c.h.b16 %v70
    %v189 = vunpack.c.l.b16 %v71
    %v190 = vunpack.c.h.b16 %v71
    %v191 = vunpack.c.l.b16 %v72
    %v192 = vunpack.c.h.b16 %v72
    %v193 = vunpack.c.l.b16 %v73
    %v194 = vunpack.c.h.b16 %v73
    %v195 = vunpack.c.l.b16 %v74
    %v196 = vunpack.c.h.b16 %v74
    %v197 = vunpack.c.l.b16 %v75
    %v198 = vunpack.c.h.b16 %v75
    %v199 = vunpack.c.l.b16 %v76
    %v200 = vunpack.c.h.b16 %v76
    %v201 = vunpack.c.l.b16 %v77
    %v202 = vunpack.c.h.b16 %v77
    %v203 = vunpack.c.l.b16 %v78
    %v204 = vunpack.c.h.b16 %v78
    %v205 = vunpack.c.l.b16 %v79
    %v206 = vunpack.c.h.b16 %v79
    %v207 = vunpack.c.l.b16 %v80
    %v208 = vunpack.c.h.b16 %v80
    %v209 = vunpack.c.l.b16 %v81
    %v210 = vunpack.c.h.b16 %v81
    %v211 = vunpack.c.l.b16 %v82
    %v212 = vunpack.c.h.b16 %v82
    %v213 = vunpack.c.l.b16 %v83
    %v214 = vunpack.c.h.b16 %v83
    %v215 = vunpack.c.l.b16 %v84
    %v216 = vunpack.c.h.b16 %v84
    %v217 = vunpack.c.l.b16 %v85
    %v218 = vunpack.c.h.b16 %v85
    %v219 = vunpack.c.l.b16 %v86
    %v220 = vunpack.c.h.b16 %v86
    %v221 = vunpack.c.l.b16 %v87
    %v222 = vunpack.c.h.b16 %v87
    %v223 = vunpack.c.l.b16 %v88
    %v224 = vunpack.c.h.b16 %v88
    %v225 = vunpack.c.l.b16 %v89
    %v226 = vunpack.c.h.b16 %v89
    %v227 = vunpack.c.l.b16 %v90
    %v228 = vunpack.c.h.b16 %v90
    %v229 = vunpack.c.l.b16 %v91
    %v230 = vunpack.c.h.b16 %v91
    %v231 = vunpack.c.l.b16 %v92
    %v232 = vunpack.c.h.b16 %v92
    %v233 = vunpack.c.l.b16 %v93
    %v234 = vunpack.c.h.b16 %v93
    %v235 = vunpack.c.l.b16 %v94
    %v236 = vunpack.c.h.b16 %v94
    %v237 = vpack.c.b16 %v177, %v173
    %v238 = vpack.c.b16 %v178, %v174
    %v239 = vpack.c.b16 %v179, %v175
    %v240 = vpack.c.b16 %v180, %v176
    %v241 = vpack.c.b16 %v185, %v181
    %v242 = vpack.c.b16 %v186, %v182
    %v243 = vpack.c.b16 %v187, %v183
    %v244 = vpack.c.b16 %v188, %v184
    %v245 = vpack.c.b16 %v193, %v189
    %v246 = vpack.c.b16 %v194, %v190
    %v247 = vpack.c.b16 %v195, %v191
    %v248 = vpack.c.b16 %v196, %v192
    %v249 = vpack.c.b16 %v201, %v197
    %v250 = vpack.c.b16 %v202, %v198
    %v251 = vpack.c.b16 %v203, %v199
    %v252 = vpack.c.b16 %v204, %v200
    %v253 = vpack.c.b16 %v209, %v205
    %v254 = vpack.c.b16 %v210, %v206
    %v255 = vpack.c.b16 %v211, %v207
    %v256 = vpack.c.b16 %v212, %v208
    %v257 = vpack.c.b16 %v217, %v213
    %v258 = vpack.c.b16 %v218, %v214
    %v259 = vpack.c.b16 %v219, %v215
    %v260 = vpack.c.b16 %v220, %v216
    %v261 = vpack.c.b16 %v225, %v221
    %v262 = vpack.c.b16 %v226, %v222
    %v263 = vpack.c.b16 %v227, %v223
    %v264 = vpack.c.b16 %v228, %v224
    %v265 = vpack.c.b16 %v233, %v229
    %v266 = vpack.c.b16 %v234, %v230
    %v267 = vpack.c.b16 %v235, %v231
    %v268 = vpack.c.b16 %v236, %v232
    %301 = vmatprep.subr.bf16.mxu0 %v238
    %302 = vmatpush1.bf16.msra.mxu0 %v237
    %303 = vmatprep.subr.bf16.mxu0 %v242
    %304 = vmatpush1.bf16.msra.mxu0 %v241
    %305 = vmatprep.subr.bf16.mxu0 %v246
    %306 = vmatpush1.bf16.msra.mxu0 %v245
    %307 = vmatprep.subr.bf16.mxu0 %v250
    %308 = vmatpush1.bf16.msra.mxu0 %v249
    %309 = vmatprep.subr.bf16.mxu0 %v254
    %310 = vmatpush1.bf16.msra.mxu0 %v253
    %311 = vmatprep.subr.bf16.mxu0 %v258
    %312 = vmatpush1.bf16.msra.mxu0 %v257
    %313 = vmatprep.subr.bf16.mxu0 %v262
    %314 = vmatpush1.bf16.msra.mxu0 %v261
    %315 = vmatprep.subr.bf16.mxu0 %v266
    %316 = vmatpush1.bf16.msra.mxu0 %v265
    %317 = vmatprep.subr.bf16.mxu0 0
    %318 = vmatpush1.bf16.msra.mxu0 0
    %319 = vmatprep.subr.bf16.mxu0 0
    %320 = vmatpush1.bf16.msra.mxu0 0
    %321 = vmatprep.subr.bf16.mxu0 0
    %322 = vmatpush1.bf16.msra.mxu0 0
    %323 = vmatprep.subr.bf16.mxu0 0
    %324 = vmatpush1.bf16.msra.mxu0 0
    %325 = vmatprep.subr.bf16.mxu0 0
    %326 = vmatpush1.bf16.msra.mxu0 0
    %327 = vmatprep.subr.bf16.mxu0 0
    %328 = vmatpush1.bf16.msra.mxu0 0
    %329 = vmatprep.subr.bf16.mxu0 0
    %330 = vmatpush1.bf16.msra.mxu0 0
    %331 = vmatprep.subr.bf16.mxu0 0
    %332 = vmatpush1.bf16.msra.mxu0 0
    %333 = vmatprep.mubr.bf16.mxu0 0
    %334 = vmatmul.mubr.bf16.gmra.mrb[0].mxu0 %v133
    %v335 = vpop.f32.mrb[0].mxu0
    %v336 = vadd.f32 %v100, %v335
    %v337 = vpop.f32.mrb[0].mxu0
    %v338 = vadd.f32 %v104, %v337
    %v339 = vpop.f32.mrb[0].mxu0
    %v340 = vadd.f32 %v100, %v339
    %v341 = vpop.f32.mrb[0].mxu0
    %v342 = vadd.f32 %v104, %v341
    %343 = vmatprep.mubr.bf16.mxu0 0
    %344 = vmatmul.mubr.bf16.gmra.mrb[0].mxu0 %v134
    %v345 = vpop.f32.mrb[0].mxu0
    %v346 = vadd.f32 %v100, %v345
    %v347 = vpop.f32.mrb[0].mxu0
    %v348 = vadd.f32 %v104, %v347
    %v349 = vpop.f32.mrb[0].mxu0
    %v350 = vadd.f32 %v100, %v349
    %v351 = vpop.f32.mrb[0].mxu0
    %v352 = vadd.f32 %v104, %v351
    %353 = vmatprep.mubr.bf16.mxu0 0
    %354 = vmatmul.mubr.bf16.gmra.mrb[0].mxu0 %v135
    %v355 = vpop.f32.mrb[0].mxu0
    %v356 = vadd.f32 %v100, %v355
    %v357 = vpop.f32.mrb[0].mxu0
    %v358 = vadd.f32 %v104, %v357
    %v359 = vpop.f32.mrb[0].mxu0
    %v360 = vadd.f32 %v100, %v359
    %v361 = vpop.f32.mrb[0].mxu0
    %v362 = vadd.f32 %v104, %v361
    %363 = vmatprep.mubr.bf16.mxu0 0
    %364 = vmatmul.mubr.bf16.gmra.mrb[0].mxu0 %v136
    %v365 = vpop.f32.mrb[0].mxu0
    %v366 = vadd.f32 %v100, %v365
    %v367 = vpop.f32.mrb[0].mxu0
    %v368 = vadd.f32 %v104, %v367
    %v369 = vpop.f32.mrb[0].mxu0
    %v370 = vadd.f32 %v100, %v369
    %v371 = vpop.f32.mrb[0].mxu0
    %v372 = vadd.f32 %v104, %v371
    %373 = vdwg.mxu0
    %374 = vmatprep.subr.bf16.mxu0 %v240
    %375 = vmatpush1.bf16.msra.mxu0 %v239
    %376 = vmatprep.subr.bf16.mxu0 %v244
    %377 = vmatpush1.bf16.msra.mxu0 %v243
    %378 = vmatprep.subr.bf16.mxu0 %v248
    %379 = vmatpush1.bf16.msra.mxu0 %v247
    %380 = vmatprep.subr.bf16.mxu0 %v252
    %381 = vmatpush1.bf16.msra.mxu0 %v251
    %382 = vmatprep.subr.bf16.mxu0 %v256
    %383 = vmatpush1.bf16.msra.mxu0 %v255
    %384 = vmatprep.subr.bf16.mxu0 %v260
    %385 = vmatpush1.bf16.msra.mxu0 %v259
    %386 = vmatprep.subr.bf16.mxu0 %v264
    %387 = vmatpush1.bf16.msra.mxu0 %v263
    %388 = vmatprep.subr.bf16.mxu0 %v268
    %389 = vmatpush1.bf16.msra.mxu0 %v267
    %390 = vmatprep.subr.bf16.mxu0 0
    %391 = vmatpush1.bf16.msra.mxu0 0
    %392 = vmatprep.subr.bf16.mxu0 0
    %393 = vmatpush1.bf16.msra.mxu0 0
    %394 = vmatprep.subr.bf16.mxu0 0
    %395 = vmatpush1.bf16.msra.mxu0 0
    %396 = vmatprep.subr.bf16.mxu0 0
    %397 = vmatpush1.bf16.msra.mxu0 0
    %398 = vmatprep.subr.bf16.mxu0 0
    %399 = vmatpush1.bf16.msra.mxu0 0
    %400 = vmatprep.subr.bf16.mxu0 0
    %401 = vmatpush1.bf16.msra.mxu0 0
    %402 = vmatprep.subr.bf16.mxu0 0
    %403 = vmatpush1.bf16.msra.mxu0 0
    %404 = vmatprep.subr.bf16.mxu0 0
    %405 = vmatpush1.bf16.msra.mxu0 0
    %406 = vmatprep.mubr.bf16.mxu0 0
    %407 = vmatmul.mubr.bf16.gmra.mrb[0].mxu0 %v133
    %v408 = vpop.f32.mrb[0].mxu0
    %v409 = vadd.f32 %v108, %v408
    %v410 = vpop.f32.mrb[0].mxu0
    %v411 = vadd.f32 %v112, %v410
    %v412 = vpop.f32.mrb[0].mxu0
    %v413 = vadd.f32 %v108, %v412
    %v414 = vpop.f32.mrb[0].mxu0
    %v415 = vadd.f32 %v112, %v414
    %416 = vmatprep.mubr.bf16.mxu0 0
    %417 = vmatmul.mubr.bf16.gmra.mrb[0].mxu0 %v134
    %v418 = vpop.f32.mrb[0].mxu0
    %v419 = vadd.f32 %v108, %v418
    %v420 = vpop.f32.mrb[0].mxu0
    %v421 = vadd.f32 %v112, %v420
    %v422 = vpop.f32.mrb[0].mxu0
    %v423 = vadd.f32 %v108, %v422
    %v424 = vpop.f32.mrb[0].mxu0
    %v425 = vadd.f32 %v112, %v424
    %426 = vmatprep.mubr.bf16.mxu0 0
    %427 = vmatmul.mubr.bf16.gmra.mrb[0].mxu0 %v135
    %v428 = vpop.f32.mrb[0].mxu0
    %v429 = vadd.f32 %v108, %v428
    %v430 = vpop.f32.mrb[0].mxu0
    %v431 = vadd.f32 %v112, %v430
    %v432 = vpop.f32.mrb[0].mxu0
    %v433 = vadd.f32 %v108, %v432
    %v434 = vpop.f32.mrb[0].mxu0
    %v435 = vadd.f32 %v112, %v434
    %436 = vmatprep.mubr.bf16.mxu0 0
    %437 = vmatmul.mubr.bf16.gmra.mrb[0].mxu0 %v136
    %v438 = vpop.f32.mrb[0].mxu0
    %v439 = vadd.f32 %v108, %v438
    %v440 = vpop.f32.mrb[0].mxu0
    %v441 = vadd.f32 %v112, %v440
    %v442 = vpop.f32.mrb[0].mxu0
    %v443 = vadd.f32 %v108, %v442
    %v444 = vpop.f32.mrb[0].mxu0
    %v445 = vadd.f32 %v112, %v444
    %446 = vdwg.mxu0
    %447 = vst [vmem:[#allocation8] sm:$0xff] %v336
    %448 = vst [vmem:[#allocation8 + $0x8] sm:$0xff] %v338
    %449 = vst [vmem:[#allocation8 + $0x10] sm:$0xff] %v409
    %450 = vst [vmem:[#allocation8 + $0x18] sm:$0xff] %v411
    %451 = vst [vmem:[#allocation8 + $0x20] sm:$0xff] %v340
    %452 = vst [vmem:[#allocation8 + $0x28] sm:$0xff] %v342
    %453 = vst [vmem:[#allocation8 + $0x30] sm:$0xff] %v413
    %454 = vst [vmem:[#allocation8 + $0x38] sm:$0xff] %v415
    %455 = vst [vmem:[#allocation8 + $0x40] sm:$0xff] %v346
    %456 = vst [vmem:[#allocation8 + $0x48] sm:$0xff] %v348
    %457 = vst [vmem:[#allocation8 + $0x50] sm:$0xff] %v419
    %458 = vst [vmem:[#allocation8 + $0x58] sm:$0xff] %v421
    %459 = vst [vmem:[#allocation8 + $0x60] sm:$0xff] %v350
    %460 = vst [vmem:[#allocation8 + $0x68] sm:$0xff] %v352
    %461 = vst [vmem:[#allocation8 + $0x70] sm:$0xff] %v423
    %462 = vst [vmem:[#allocation8 + $0x78] sm:$0xff] %v425
    %463 = vst [vmem:[#allocation8 + $0x80] sm:$0xff] %v356
    %464 = vst [vmem:[#allocation8 + $0x88] sm:$0xff] %v358
    %465 = vst [vmem:[#allocation8 + $0x90] sm:$0xff] %v429
    %466 = vst [vmem:[#allocation8 + $0x98] sm:$0xff] %v431
    %467 = vst [vmem:[#allocation8 + $0xa0] sm:$0xff] %v360
    %468 = vst [vmem:[#allocation8 + $0xa8] sm:$0xff] %v362
    %469 = vst [vmem:[#allocation8 + $0xb0] sm:$0xff] %v433
    %470 = vst [vmem:[#allocation8 + $0xb8] sm:$0xff] %v435
    %471 = vst [vmem:[#allocation8 + $0xc0] sm:$0xff] %v366
    %472 = vst [vmem:[#allocation8 + $0xc8] sm:$0xff] %v368
    %473 = vst [vmem:[#allocation8 + $0xd0] sm:$0xff] %v439
    %474 = vst [vmem:[#allocation8 + $0xd8] sm:$0xff] %v441
    %475 = vst [vmem:[#allocation8 + $0xe0] sm:$0xff] %v370
    %476 = vst [vmem:[#allocation8 + $0xe8] sm:$0xff] %v372
    %477 = vst [vmem:[#allocation8 + $0xf0] sm:$0xff] %v443
    %478 = vst [vmem:[#allocation8 + $0xf8] sm:$0xff] %v445
    // Predicated region
    $region26: #{tpu_custom_call.1} parent=1 // pred_check
      _
    $region27: #{tpu_custom_call.1} parent=1 // pred_check_branch
      %480 = sbr.rel (0) target = $region29
    $region28: #{tpu_custom_call.1} parent=1 // pred_region
      %s482 = ssub.s32 4096, 4096
      %483 = vsyncadd [#allocation4], %s482
      %s484 = sshll.u32 [#allocation8], 4
      %s485 = int_to_ptr.vmem [resolvable:$true] %s484
      %490 = dma.vmem_to_hbm [thread:$0]  %s485, 4096, %s3, [#allocation4], 512, 512, 32
    $region29: #{tpu_custom_call.1} parent=1 // pred_fallthru
      _
    // Predicated region
    $region30: #{tpu_custom_call.1} parent=1 // pred_check
      _
    $region31: #{tpu_custom_call.1} parent=1 // pred_check_branch
      %492 = sbr.rel (0) target = $region33
    $region32: #{tpu_custom_call.1} parent=1 // pred_region
      %493 = dma.done [#allocation4], 4096
    $region33: #{tpu_custom_call.1} parent=1 // pred_fallthru
      _
    %494 = vsyncpa [#allocation3], 1
    %495 = vsyncpa [#allocation6], 1
    %496 = vsyncpa [#allocation4], 1

</llo_original>
